<compile_context>
chip_gen: v7x
topology: tpu7x:2x2x1
jax: 0.10.0
libtpu: 0.0.40
codegen_flags: <defaults>
</compile_context>

<pallas_src>
import functools

import jax
import jax.numpy as jnp
from jax.experimental import pallas as pl
from jax.experimental.pallas import tpu as pltpu

NUM_HIDDEN_CH = 10  # Conv1d(1, 10, K) hidden channels


def _round_up(a, m):
    return (a + m - 1) // m * m


def _vmem_capacity_bytes():
    """Generation-aware VMEM capacity (falls back to the v7x 64 MiB floor)."""
    try:
        cap = int(pltpu.get_tpu_info().vmem_capacity_bytes)
        if cap > 0:
            return cap
    except Exception:
        pass
    return 64 * 1024 * 1024


def _ccann_kernel(x_ref, w1_ref, b1_ref, w2_ref, b2_ref, out_ref, *,
                  conv_size, length_axis, compute_dtype):
    """Fused Conv1d(1,10,K) -> tanh -> Conv1d(10,1,1) on one tile.

    x_ref  : VMEM f32; the length axis carries out_len + (K-1) halo elements.
    w1_ref : SMEM (10*K,) f32   (conv1 weight, flattened row-major [c, k])
    b1_ref : SMEM (10,)   f32
    w2_ref : SMEM (10,)   f32   (1x1 conv weight)
    b2_ref : SMEM (1,)    f32
    out_ref: VMEM f32, one output block (padded rows/lanes are sliced off
             outside the kernel).
    """
    out_shape = out_ref.shape
    out_len = out_shape[length_axis]

    # Hoist the K shifted taps (shared by all 10 hidden channels): static
    # halo loads — vld/XLU work, kept off the saturating VALU slot.
    taps = []
    for k in range(conv_size):
        if length_axis == 0:
            xk = x_ref[pl.ds(k, out_len), :]
        else:
            xk = x_ref[:, pl.ds(k, out_len)]
        taps.append(xk.astype(compute_dtype))

    # 1x1 output-conv bias folded into the accumulator init (always f32).
    acc = jnp.full(out_shape, b2_ref[0], jnp.float32)
    for c in range(NUM_HIDDEN_CH):
        # conv1 bias folded into the per-channel init.
        z = jnp.full(out_shape, b1_ref[c], compute_dtype)
        for k in range(conv_size):
            z = z + w1_ref[c * conv_size + k].astype(compute_dtype) * taps[k]
        # TODO(synk): inspect the Mosaic bundle dump; if jnp.tanh decomposes
        # into VALU exp/div sequences, switch to an EUP-centric form
        # (1 - 2 * pl.reciprocal(jnp.exp(2*z) + 1, approx=True)).
        acc = acc + w2_ref[c] * jnp.tanh(z).astype(jnp.float32)
    out_ref[...] = acc


def ccann_forward(x_ncl, w1, b1, w2, b2, *, compute_dtype=jnp.float32):
    """x_ncl: (N, 1, L) float32 (PyTorch NCL). Returns (N, 1, L - K + 1).

    Set compute_dtype=jnp.bfloat16 on v6e/v7x for ~2x VALU/EUP throughput
    (accumulator stays f32; re-validate tolerance before relying on it).
    """
    n, cin, l = x_ncl.shape
    assert cin == 1
    k_size = w1.shape[2]
    lout = l - k_size + 1
    assert lout >= 1

    x2 = x_ncl.reshape(n, l).astype(jnp.float32)

    # ---- generation-aware VMEM budget / explicit compiler limit ----------
    vmem_cap = _vmem_capacity_bytes()
    # ~48 MiB on v7x (64 MiB physical), 64 MiB on v5e/v6e (128 MiB physical).
    vmem_limit = min(vmem_cap * 3 // 4, 64 * 1024 * 1024)

    # ---- layout choice: keep the 128-lane axis dense ----------------------
    if l >= 128:
        # Layout A: batch on sublanes, length on lanes.
        length_axis = 1
        out_len = _round_up(lout, 128)
        in_len = _round_up(out_len + k_size - 1, 128)    # >= l
        unit = 8                                         # batch rows per unit
        in_unit_bytes = unit * in_len * 4
        out_unit_bytes = unit * out_len * 4
    else:
        # Layout B: length on sublanes, batch on lanes (dense for small L).
        length_axis = 0
        out_len = _round_up(lout, 8)
        in_len = _round_up(out_len + k_size - 1, 8)      # >= l
        unit = 128                                       # batch lanes per unit
        in_unit_bytes = in_len * unit * 4
        out_unit_bytes = out_len * unit * 4

    n_units = _round_up(n, unit) // unit

    # ---- batch-tile size ---------------------------------------------------
    # Live VMEM per batch unit: double-buffered in/out blocks + the K hoisted
    # taps + z + acc temporaries (a function of K, per the perf review).
    live_per_unit = (2 * in_unit_bytes + 2 * out_unit_bytes
                     + (k_size + 2) * out_unit_bytes)
    max_units_vmem = max(1, vmem_limit // live_per_unit)
    units = min(n_units, max_units_vmem)
    if n_units >= 2:
        # Keep >= 2 grid steps (v7x megacore sharding); prefer 4-8 steps while
        # each input block stays >= ~1 MiB (per-step overhead ~0.35 us).
        min_units_per_block = max(1, (1 << 20) // in_unit_bytes)
        steps = 2
        for s in (8, 4):
            if -(-n_units // s) >= min_units_per_block:
                steps = s
                break
        units = min(units, -(-n_units // steps))
    units = max(units, 1)

    tn = units * unit
    n_pad = _round_up(n, tn)
    grid = (n_pad // tn,)

    # ---- lay out the (zero padded) input slab -----------------------------
    # TODO(synk): when no padding is needed the .at[].set() copy could be
    # skipped / buffers donated to cut wrapper-side HBM traffic further.
    if length_axis == 1:
        x2d = jnp.zeros((n_pad, in_len), jnp.float32).at[:n, :l].set(x2)
        in_block, out_block = (tn, in_len), (tn, out_len)
        out_shape2d = (n_pad, out_len)
        index_map = lambda i: (i, 0)
    else:
        x2d = jnp.zeros((in_len, n_pad), jnp.float32).at[:l, :n].set(x2.T)
        in_block, out_block = (in_len, tn), (out_len, tn)
        out_shape2d = (out_len, n_pad)
        index_map = lambda i: (0, i)

    w1_1d = w1.reshape(NUM_HIDDEN_CH * k_size).astype(jnp.float32)  # (10*K,)
    b1_1d = b1.reshape(NUM_HIDDEN_CH).astype(jnp.float32)           # (10,)
    w2_1d = w2.reshape(NUM_HIDDEN_CH).astype(jnp.float32)           # (10,)
    b2_1d = b2.reshape(1).astype(jnp.float32)                       # (1,)

    kernel = functools.partial(
        _ccann_kernel, conv_size=k_size, length_axis=length_axis,
        compute_dtype=compute_dtype)

    out2d = pl.pallas_call(
        kernel,
        out_shape=jax.ShapeDtypeStruct(out_shape2d, jnp.float32),
        grid=grid,
        in_specs=[
            pl.BlockSpec(in_block, index_map),                      # x tile
            pl.BlockSpec(memory_space=pltpu.MemorySpace.SMEM),      # w1
            pl.BlockSpec(memory_space=pltpu.MemorySpace.SMEM),      # b1
            pl.BlockSpec(memory_space=pltpu.MemorySpace.SMEM),      # w2
            pl.BlockSpec(memory_space=pltpu.MemorySpace.SMEM),      # b2
        ],
        out_specs=pl.BlockSpec(out_block, index_map),
        compiler_params=pltpu.CompilerParams(
            dimension_semantics=("parallel",),
            vmem_limit_bytes=int(vmem_limit),
        ),
        cost_estimate=pl.CostEstimate(
            flops=2 * n * lout * NUM_HIDDEN_CH * (k_size + 1),
            transcendentals=NUM_HIDDEN_CH * n * lout,
            bytes_accessed=4 * (x2d.size + out_shape2d[0] * out_shape2d[1]),
        ),
    )(x2d, w1_1d, b1_1d, w2_1d, b2_1d)

    # TODO(synk): if L itself can be very large, additionally tile the length
    # axis with a (K-1) halo instead of keeping full-length blocks.
    if length_axis == 1:
        y = out2d[:n, :lout]
    else:
        y = out2d[:lout, :n].T
    return y.reshape(n, 1, lout)


def _reference_forward(x_ncl, w1, b1, w2, b2):
    """Pure-JAX reference of the PyTorch forward (for correctness check)."""
    n, _, l = x_ncl.shape
    k_size = w1.shape[2]
    lout = l - k_size + 1
    x = x_ncl[:, 0, :]                                       # (N, L)
    patches = jnp.stack([x[:, k:k + lout] for k in range(k_size)], axis=-1)
    h = jnp.tanh(jnp.einsum("ntk,ck->ntc", patches, w1[:, 0, :]) + b1)
    y = jnp.einsum("ntc,c->nt", h, w2[0, :, 0]) + b2[0]
    return y[:, None, :]                                     # (N, 1, Lout)


if __name__ == "__main__":
    key = jax.random.PRNGKey(0)
    kx, k1, k2, k3, k4 = jax.random.split(key, 5)

    # Small shapes consistent with the module's forward: x is (N, 1, L).
    N, L, CONV_SIZE = 2, 16, 3

    x = jax.random.normal(kx, (N, 1, L), dtype=jnp.float32)

    # Deterministic synthetic parameters (shapes match nn.Conv1d).
    w1 = 0.3 * jax.random.normal(k1, (NUM_HIDDEN_CH, 1, CONV_SIZE), jnp.float32)
    b1 = 0.1 * jax.random.normal(k2, (NUM_HIDDEN_CH,), jnp.float32)
    w2 = 0.3 * jax.random.normal(k3, (1, NUM_HIDDEN_CH, 1), jnp.float32)
    b2 = 0.1 * jax.random.normal(k4, (1,), jnp.float32)

    out = ccann_forward(x, w1, b1, w2, b2)
    out = jax.block_until_ready(out)

    ref = _reference_forward(x, w1, b1, w2, b2)
    assert out.shape == (N, 1, L - CONV_SIZE + 1)
    assert jnp.allclose(out, ref, atol=1e-5, rtol=1e-5)

    print("KERNEL_OK")
</pallas_src>

<mosaic_0001>
module attributes {stable_mosaic.version = 11 : i64} {
  func.func @_ccann_kernel(%arg0: i32, %arg1: memref<24x128xf32, #tpu.memory_space<vmem>>, %arg2: memref<30xf32, #tpu.memory_space<smem>>, %arg3: memref<10xf32, #tpu.memory_space<smem>>, %arg4: memref<10xf32, #tpu.memory_space<smem>>, %arg5: memref<1xf32, #tpu.memory_space<smem>>, %arg6: memref<16x128xf32, #tpu.memory_space<vmem>>) attributes {dimension_semantics = [#tpu.dimension_semantics<parallel>], iteration_bounds = array<i64: 1>, scalar_prefetch = 0 : i64, scratch_operands = 0 : i64, tpu.core_type = #tpu.core_type<tc>, window_params = [{transform_indices = @transform_0, window_bounds = array<i64: 24, 128>}, {transform_indices = @transform_1, window_bounds = array<i64: 30>}, {transform_indices = @transform_2, window_bounds = array<i64: 10>}, {transform_indices = @transform_3, window_bounds = array<i64: 10>}, {transform_indices = @transform_4, window_bounds = array<i64: 1>}, {transform_indices = @transform_5, window_bounds = array<i64: 16, 128>}]} {
    %c0 = arith.constant 0 : index
    %c0_0 = arith.constant 0 : index
    %0 = vector.load %arg1[%c0, %c0_0] : memref<24x128xf32, #tpu.memory_space<vmem>>, vector<16x128xf32>
    %c1 = arith.constant 1 : index
    %c0_1 = arith.constant 0 : index
    %1 = vector.load %arg1[%c1, %c0_1] : memref<24x128xf32, #tpu.memory_space<vmem>>, vector<16x128xf32>
    %c2 = arith.constant 2 : index
    %c0_2 = arith.constant 0 : index
    %2 = vector.load %arg1[%c2, %c0_2] : memref<24x128xf32, #tpu.memory_space<vmem>>, vector<16x128xf32>
    %c0_3 = arith.constant 0 : index
    %3 = memref.load %arg5[%c0_3] : memref<1xf32, #tpu.memory_space<smem>>
    %4 = vector.broadcast %3 : f32 to vector<16x128xf32>
    %c0_4 = arith.constant 0 : index
    %5 = memref.load %arg3[%c0_4] : memref<10xf32, #tpu.memory_space<smem>>
    %6 = vector.broadcast %5 : f32 to vector<16x128xf32>
    %c0_5 = arith.constant 0 : index
    %7 = memref.load %arg2[%c0_5] : memref<30xf32, #tpu.memory_space<smem>>
    %8 = vector.broadcast %7 : f32 to vector<16x128xf32>
    %9 = arith.mulf %8, %0 : vector<16x128xf32>
    %10 = arith.addf %6, %9 : vector<16x128xf32>
    %c1_6 = arith.constant 1 : index
    %11 = memref.load %arg2[%c1_6] : memref<30xf32, #tpu.memory_space<smem>>
    %12 = vector.broadcast %11 : f32 to vector<16x128xf32>
    %13 = arith.mulf %12, %1 : vector<16x128xf32>
    %14 = arith.addf %10, %13 : vector<16x128xf32>
    %c2_7 = arith.constant 2 : index
    %15 = memref.load %arg2[%c2_7] : memref<30xf32, #tpu.memory_space<smem>>
    %16 = vector.broadcast %15 : f32 to vector<16x128xf32>
    %17 = arith.mulf %16, %2 : vector<16x128xf32>
    %18 = arith.addf %14, %17 : vector<16x128xf32>
    %c0_8 = arith.constant 0 : index
    %19 = memref.load %arg4[%c0_8] : memref<10xf32, #tpu.memory_space<smem>>
    %20 = math.tanh %18 : vector<16x128xf32>
    %21 = vector.broadcast %19 : f32 to vector<16x128xf32>
    %22 = arith.mulf %21, %20 : vector<16x128xf32>
    %23 = arith.addf %4, %22 : vector<16x128xf32>
    %c1_9 = arith.constant 1 : index
    %24 = memref.load %arg3[%c1_9] : memref<10xf32, #tpu.memory_space<smem>>
    %25 = vector.broadcast %24 : f32 to vector<16x128xf32>
    %c3 = arith.constant 3 : index
    %26 = memref.load %arg2[%c3] : memref<30xf32, #tpu.memory_space<smem>>
    %27 = vector.broadcast %26 : f32 to vector<16x128xf32>
    %28 = arith.mulf %27, %0 : vector<16x128xf32>
    %29 = arith.addf %25, %28 : vector<16x128xf32>
    %c4 = arith.constant 4 : index
    %30 = memref.load %arg2[%c4] : memref<30xf32, #tpu.memory_space<smem>>
    %31 = vector.broadcast %30 : f32 to vector<16x128xf32>
    %32 = arith.mulf %31, %1 : vector<16x128xf32>
    %33 = arith.addf %29, %32 : vector<16x128xf32>
    %c5 = arith.constant 5 : index
    %34 = memref.load %arg2[%c5] : memref<30xf32, #tpu.memory_space<smem>>
    %35 = vector.broadcast %34 : f32 to vector<16x128xf32>
    %36 = arith.mulf %35, %2 : vector<16x128xf32>
    %37 = arith.addf %33, %36 : vector<16x128xf32>
    %c1_10 = arith.constant 1 : index
    %38 = memref.load %arg4[%c1_10] : memref<10xf32, #tpu.memory_space<smem>>
    %39 = math.tanh %37 : vector<16x128xf32>
    %40 = vector.broadcast %38 : f32 to vector<16x128xf32>
    %41 = arith.mulf %40, %39 : vector<16x128xf32>
    %42 = arith.addf %23, %41 : vector<16x128xf32>
    %c2_11 = arith.constant 2 : index
    %43 = memref.load %arg3[%c2_11] : memref<10xf32, #tpu.memory_space<smem>>
    %44 = vector.broadcast %43 : f32 to vector<16x128xf32>
    %c6 = arith.constant 6 : index
    %45 = memref.load %arg2[%c6] : memref<30xf32, #tpu.memory_space<smem>>
    %46 = vector.broadcast %45 : f32 to vector<16x128xf32>
    %47 = arith.mulf %46, %0 : vector<16x128xf32>
    %48 = arith.addf %44, %47 : vector<16x128xf32>
    %c7 = arith.constant 7 : index
    %49 = memref.load %arg2[%c7] : memref<30xf32, #tpu.memory_space<smem>>
    %50 = vector.broadcast %49 : f32 to vector<16x128xf32>
    %51 = arith.mulf %50, %1 : vector<16x128xf32>
    %52 = arith.addf %48, %51 : vector<16x128xf32>
    %c8 = arith.constant 8 : index
    %53 = memref.load %arg2[%c8] : memref<30xf32, #tpu.memory_space<smem>>
    %54 = vector.broadcast %53 : f32 to vector<16x128xf32>
    %55 = arith.mulf %54, %2 : vector<16x128xf32>
    %56 = arith.addf %52, %55 : vector<16x128xf32>
    %c2_12 = arith.constant 2 : index
    %57 = memref.load %arg4[%c2_12] : memref<10xf32, #tpu.memory_space<smem>>
    %58 = math.tanh %56 : vector<16x128xf32>
    %59 = vector.broadcast %57 : f32 to vector<16x128xf32>
    %60 = arith.mulf %59, %58 : vector<16x128xf32>
    %61 = arith.addf %42, %60 : vector<16x128xf32>
    %c3_13 = arith.constant 3 : index
    %62 = memref.load %arg3[%c3_13] : memref<10xf32, #tpu.memory_space<smem>>
    %63 = vector.broadcast %62 : f32 to vector<16x128xf32>
    %c9 = arith.constant 9 : index
    %64 = memref.load %arg2[%c9] : memref<30xf32, #tpu.memory_space<smem>>
    %65 = vector.broadcast %64 : f32 to vector<16x128xf32>
    %66 = arith.mulf %65, %0 : vector<16x128xf32>
    %67 = arith.addf %63, %66 : vector<16x128xf32>
    %c10 = arith.constant 10 : index
    %68 = memref.load %arg2[%c10] : memref<30xf32, #tpu.memory_space<smem>>
    %69 = vector.broadcast %68 : f32 to vector<16x128xf32>
    %70 = arith.mulf %69, %1 : vector<16x128xf32>
    %71 = arith.addf %67, %70 : vector<16x128xf32>
    %c11 = arith.constant 11 : index
    %72 = memref.load %arg2[%c11] : memref<30xf32, #tpu.memory_space<smem>>
    %73 = vector.broadcast %72 : f32 to vector<16x128xf32>
    %74 = arith.mulf %73, %2 : vector<16x128xf32>
    %75 = arith.addf %71, %74 : vector<16x128xf32>
    %c3_14 = arith.constant 3 : index
    %76 = memref.load %arg4[%c3_14] : memref<10xf32, #tpu.memory_space<smem>>
    %77 = math.tanh %75 : vector<16x128xf32>
    %78 = vector.broadcast %76 : f32 to vector<16x128xf32>
    %79 = arith.mulf %78, %77 : vector<16x128xf32>
    %80 = arith.addf %61, %79 : vector<16x128xf32>
    %c4_15 = arith.constant 4 : index
    %81 = memref.load %arg3[%c4_15] : memref<10xf32, #tpu.memory_space<smem>>
    %82 = vector.broadcast %81 : f32 to vector<16x128xf32>
    %c12 = arith.constant 12 : index
    %83 = memref.load %arg2[%c12] : memref<30xf32, #tpu.memory_space<smem>>
    %84 = vector.broadcast %83 : f32 to vector<16x128xf32>
    %85 = arith.mulf %84, %0 : vector<16x128xf32>
    %86 = arith.addf %82, %85 : vector<16x128xf32>
    %c13 = arith.constant 13 : index
    %87 = memref.load %arg2[%c13] : memref<30xf32, #tpu.memory_space<smem>>
    %88 = vector.broadcast %87 : f32 to vector<16x128xf32>
    %89 = arith.mulf %88, %1 : vector<16x128xf32>
    %90 = arith.addf %86, %89 : vector<16x128xf32>
    %c14 = arith.constant 14 : index
    %91 = memref.load %arg2[%c14] : memref<30xf32, #tpu.memory_space<smem>>
    %92 = vector.broadcast %91 : f32 to vector<16x128xf32>
    %93 = arith.mulf %92, %2 : vector<16x128xf32>
    %94 = arith.addf %90, %93 : vector<16x128xf32>
    %c4_16 = arith.constant 4 : index
    %95 = memref.load %arg4[%c4_16] : memref<10xf32, #tpu.memory_space<smem>>
    %96 = math.tanh %94 : vector<16x128xf32>
    %97 = vector.broadcast %95 : f32 to vector<16x128xf32>
    %98 = arith.mulf %97, %96 : vector<16x128xf32>
    %99 = arith.addf %80, %98 : vector<16x128xf32>
    %c5_17 = arith.constant 5 : index
    %100 = memref.load %arg3[%c5_17] : memref<10xf32, #tpu.memory_space<smem>>
    %101 = vector.broadcast %100 : f32 to vector<16x128xf32>
    %c15 = arith.constant 15 : index
    %102 = memref.load %arg2[%c15] : memref<30xf32, #tpu.memory_space<smem>>
    %103 = vector.broadcast %102 : f32 to vector<16x128xf32>
    %104 = arith.mulf %103, %0 : vector<16x128xf32>
    %105 = arith.addf %101, %104 : vector<16x128xf32>
    %c16 = arith.constant 16 : index
    %106 = memref.load %arg2[%c16] : memref<30xf32, #tpu.memory_space<smem>>
    %107 = vector.broadcast %106 : f32 to vector<16x128xf32>
    %108 = arith.mulf %107, %1 : vector<16x128xf32>
    %109 = arith.addf %105, %108 : vector<16x128xf32>
    %c17 = arith.constant 17 : index
    %110 = memref.load %arg2[%c17] : memref<30xf32, #tpu.memory_space<smem>>
    %111 = vector.broadcast %110 : f32 to vector<16x128xf32>
    %112 = arith.mulf %111, %2 : vector<16x128xf32>
    %113 = arith.addf %109, %112 : vector<16x128xf32>
    %c5_18 = arith.constant 5 : index
    %114 = memref.load %arg4[%c5_18] : memref<10xf32, #tpu.memory_space<smem>>
    %115 = math.tanh %113 : vector<16x128xf32>
    %116 = vector.broadcast %114 : f32 to vector<16x128xf32>
    %117 = arith.mulf %116, %115 : vector<16x128xf32>
    %118 = arith.addf %99, %117 : vector<16x128xf32>
    %c6_19 = arith.constant 6 : index
    %119 = memref.load %arg3[%c6_19] : memref<10xf32, #tpu.memory_space<smem>>
    %120 = vector.broadcast %119 : f32 to vector<16x128xf32>
    %c18 = arith.constant 18 : index
    %121 = memref.load %arg2[%c18] : memref<30xf32, #tpu.memory_space<smem>>
    %122 = vector.broadcast %121 : f32 to vector<16x128xf32>
    %123 = arith.mulf %122, %0 : vector<16x128xf32>
    %124 = arith.addf %120, %123 : vector<16x128xf32>
    %c19 = arith.constant 19 : index
    %125 = memref.load %arg2[%c19] : memref<30xf32, #tpu.memory_space<smem>>
    %126 = vector.broadcast %125 : f32 to vector<16x128xf32>
    %127 = arith.mulf %126, %1 : vector<16x128xf32>
    %128 = arith.addf %124, %127 : vector<16x128xf32>
    %c20 = arith.constant 20 : index
    %129 = memref.load %arg2[%c20] : memref<30xf32, #tpu.memory_space<smem>>
    %130 = vector.broadcast %129 : f32 to vector<16x128xf32>
    %131 = arith.mulf %130, %2 : vector<16x128xf32>
    %132 = arith.addf %128, %131 : vector<16x128xf32>
    %c6_20 = arith.constant 6 : index
    %133 = memref.load %arg4[%c6_20] : memref<10xf32, #tpu.memory_space<smem>>
    %134 = math.tanh %132 : vector<16x128xf32>
    %135 = vector.broadcast %133 : f32 to vector<16x128xf32>
    %136 = arith.mulf %135, %134 : vector<16x128xf32>
    %137 = arith.addf %118, %136 : vector<16x128xf32>
    %c7_21 = arith.constant 7 : index
    %138 = memref.load %arg3[%c7_21] : memref<10xf32, #tpu.memory_space<smem>>
    %139 = vector.broadcast %138 : f32 to vector<16x128xf32>
    %c21 = arith.constant 21 : index
    %140 = memref.load %arg2[%c21] : memref<30xf32, #tpu.memory_space<smem>>
    %141 = vector.broadcast %140 : f32 to vector<16x128xf32>
    %142 = arith.mulf %141, %0 : vector<16x128xf32>
    %143 = arith.addf %139, %142 : vector<16x128xf32>
    %c22 = arith.constant 22 : index
    %144 = memref.load %arg2[%c22] : memref<30xf32, #tpu.memory_space<smem>>
    %145 = vector.broadcast %144 : f32 to vector<16x128xf32>
    %146 = arith.mulf %145, %1 : vector<16x128xf32>
    %147 = arith.addf %143, %146 : vector<16x128xf32>
    %c23 = arith.constant 23 : index
    %148 = memref.load %arg2[%c23] : memref<30xf32, #tpu.memory_space<smem>>
    %149 = vector.broadcast %148 : f32 to vector<16x128xf32>
    %150 = arith.mulf %149, %2 : vector<16x128xf32>
    %151 = arith.addf %147, %150 : vector<16x128xf32>
    %c7_22 = arith.constant 7 : index
    %152 = memref.load %arg4[%c7_22] : memref<10xf32, #tpu.memory_space<smem>>
    %153 = math.tanh %151 : vector<16x128xf32>
    %154 = vector.broadcast %152 : f32 to vector<16x128xf32>
    %155 = arith.mulf %154, %153 : vector<16x128xf32>
    %156 = arith.addf %137, %155 : vector<16x128xf32>
    %c8_23 = arith.constant 8 : index
    %157 = memref.load %arg3[%c8_23] : memref<10xf32, #tpu.memory_space<smem>>
    %158 = vector.broadcast %157 : f32 to vector<16x128xf32>
    %c24 = arith.constant 24 : index
    %159 = memref.load %arg2[%c24] : memref<30xf32, #tpu.memory_space<smem>>
    %160 = vector.broadcast %159 : f32 to vector<16x128xf32>
    %161 = arith.mulf %160, %0 : vector<16x128xf32>
    %162 = arith.addf %158, %161 : vector<16x128xf32>
    %c25 = arith.constant 25 : index
    %163 = memref.load %arg2[%c25] : memref<30xf32, #tpu.memory_space<smem>>
    %164 = vector.broadcast %163 : f32 to vector<16x128xf32>
    %165 = arith.mulf %164, %1 : vector<16x128xf32>
    %166 = arith.addf %162, %165 : vector<16x128xf32>
    %c26 = arith.constant 26 : index
    %167 = memref.load %arg2[%c26] : memref<30xf32, #tpu.memory_space<smem>>
    %168 = vector.broadcast %167 : f32 to vector<16x128xf32>
    %169 = arith.mulf %168, %2 : vector<16x128xf32>
    %170 = arith.addf %166, %169 : vector<16x128xf32>
    %c8_24 = arith.constant 8 : index
    %171 = memref.load %arg4[%c8_24] : memref<10xf32, #tpu.memory_space<smem>>
    %172 = math.tanh %170 : vector<16x128xf32>
    %173 = vector.broadcast %171 : f32 to vector<16x128xf32>
    %174 = arith.mulf %173, %172 : vector<16x128xf32>
    %175 = arith.addf %156, %174 : vector<16x128xf32>
    %c9_25 = arith.constant 9 : index
    %176 = memref.load %arg3[%c9_25] : memref<10xf32, #tpu.memory_space<smem>>
    %177 = vector.broadcast %176 : f32 to vector<16x128xf32>
    %c27 = arith.constant 27 : index
    %178 = memref.load %arg2[%c27] : memref<30xf32, #tpu.memory_space<smem>>
    %179 = vector.broadcast %178 : f32 to vector<16x128xf32>
    %180 = arith.mulf %179, %0 : vector<16x128xf32>
    %181 = arith.addf %177, %180 : vector<16x128xf32>
    %c28 = arith.constant 28 : index
    %182 = memref.load %arg2[%c28] : memref<30xf32, #tpu.memory_space<smem>>
    %183 = vector.broadcast %182 : f32 to vector<16x128xf32>
    %184 = arith.mulf %183, %1 : vector<16x128xf32>
    %185 = arith.addf %181, %184 : vector<16x128xf32>
    %c29 = arith.constant 29 : index
    %186 = memref.load %arg2[%c29] : memref<30xf32, #tpu.memory_space<smem>>
    %187 = vector.broadcast %186 : f32 to vector<16x128xf32>
    %188 = arith.mulf %187, %2 : vector<16x128xf32>
    %189 = arith.addf %185, %188 : vector<16x128xf32>
    %c9_26 = arith.constant 9 : index
    %190 = memref.load %arg4[%c9_26] : memref<10xf32, #tpu.memory_space<smem>>
    %191 = math.tanh %189 : vector<16x128xf32>
    %192 = vector.broadcast %190 : f32 to vector<16x128xf32>
    %193 = arith.mulf %192, %191 : vector<16x128xf32>
    %194 = arith.addf %175, %193 : vector<16x128xf32>
    %c0_27 = arith.constant 0 : index
    %c0_28 = arith.constant 0 : index
    %195 = vector.load %arg6[%c0_27, %c0_28] : memref<16x128xf32, #tpu.memory_space<vmem>>, vector<16x128xf32>
    tpu.vector_store %arg6[%c0_27, %c0_28], %194 {strides = array<i32>} : memref<16x128xf32, #tpu.memory_space<vmem>>, vector<16x128xf32>,
    return
  }
  func.func @transform_0(%arg0: i32) -> (i32, i32) {
    %c0_i32 = arith.constant 0 : i32
    %c0_i32_0 = arith.constant 0 : i32
    return %c0_i32, %arg0 : i32, i32
  }
  func.func @transform_1(%arg0: i32) -> i32 {
    %c0_i32 = arith.constant 0 : i32
    %c0_i32_0 = arith.constant 0 : i32
    return %c0_i32 : i32
  }
  func.func @transform_2(%arg0: i32) -> i32 {
    %c0_i32 = arith.constant 0 : i32
    %c0_i32_0 = arith.constant 0 : i32
    return %c0_i32 : i32
  }
  func.func @transform_3(%arg0: i32) -> i32 {
    %c0_i32 = arith.constant 0 : i32
    %c0_i32_0 = arith.constant 0 : i32
    return %c0_i32 : i32
  }
  func.func @transform_4(%arg0: i32) -> i32 {
    %c0_i32 = arith.constant 0 : i32
    %c0_i32_0 = arith.constant 0 : i32
    return %c0_i32 : i32
  }
  func.func @transform_5(%arg0: i32) -> (i32, i32) {
    %c0_i32 = arith.constant 0 : i32
    %c0_i32_0 = arith.constant 0 : i32
    return %c0_i32, %arg0 : i32, i32
  }
}

</mosaic_0001>

<llo_original>
// kernel: tpu_custom_call.1
$region0: #{tpu_custom_call.1}
  #allocation0 [shape = 'u32[]', space=smem, size = 0x4, offset = 0x4, fixed_abs, tag = 'smem constant byte address 0x4 - core index']
  #allocation1 [shape = 'u32[144,128]{1,0:T(1,128)}', space=vmem, size = 0x12000, scoped, tag = 'internal scratch']
  #allocation2 [shape = 'f32[1]{0:T(128)S(6)}', space=smem, size = 0x200, scoped, tag = 'scoped memory for tpu_custom_call.1']
  %s0 = inlined_call_operand.hbm [shape: f32[24,128], index: 0, kind: input, shape index: {}]
  %s1 = inlined_call_operand.vmem [shape: f32[30], index: 1, kind: input, shape index: {}]
  %s2 = inlined_call_operand.vmem [shape: f32[10], index: 2, kind: input, shape index: {}]
  %s3 = inlined_call_operand.vmem [shape: f32[10], index: 3, kind: input, shape index: {}]
  %s4 = inlined_call_operand.<no memory space> [shape: f32[1], index: 4, kind: input, shape index: {}]
  %s5 = inlined_call_operand.hbm [shape: f32[16,128], index: 5, kind: output, shape index: {}]
  %s6 = sld [smem:[#allocation0]]
  $region46: #{tpu_custom_call.1} parent=0
    _
  %s8 = ssub.s32 1, %s6
  %s9 = scalar_select 0, %s8, %s6
  %10 = sst [smem:[#allocation2]] %s4
  $region1: #{tpu_custom_call.1} parent=0
    #allocation3 [shape = 'u8[12288]{0}', space=vmem, size = 0x3000, scoped, tag = 'input window, operand 0, single buffered']
    #allocation4 [shape = 's32[1]{0}', space=sflag, size = 0x4, scoped, tag = 'scoped memory for tpu_custom_call.1']
    #allocation5 [shape = 's32[1]{0}', space=sflag, size = 0x4, scoped, tag = 'scoped memory for tpu_custom_call.1']
    #allocation6 [shape = 's32[1]{0}', space=sflag, size = 0x4, scoped, tag = 'scoped memory for tpu_custom_call.1']
    #allocation7 [shape = 'u8[512]{0}', space=smem, size = 0x200, scoped, tag = 'input window, operand 1, single buffered']
    #allocation8 [shape = 'u8[512]{0}', space=smem, size = 0x200, scoped, tag = 'input window, operand 2, single buffered']
    #allocation9 [shape = 's32[1]{0}', space=sflag, size = 0x4, scoped, tag = 'scoped memory for tpu_custom_call.1']
    #allocation10 [shape = 'u8[512]{0}', space=smem, size = 0x200, scoped, tag = 'input window, operand 3, single buffered']
    #allocation11 [shape = 'u8[8192]{0}', space=vmem, size = 0x2000, scoped, tag = 'output window, operand 0, single buffered']
    %11 = vsyncpa [#allocation4], 0
    %12 = vsyncpa [#allocation6], 0
    %13 = vsyncpa [#allocation9], 0
    %14 = vsyncpa [#allocation5], 0
    // Predicated region
    $region2: #{tpu_custom_call.1} parent=1 // pred_check
      _
    $region3: #{tpu_custom_call.1} parent=1 // pred_check_branch
      %16 = sbr.rel (0) target = $region5
    $region4: #{tpu_custom_call.1} parent=1 // pred_region
      %s18 = ssub.s32 384, 384
      %19 = vsyncadd [#allocation4], %s18
      %s20 = sshll.u32 [#allocation3], 4
      %s21 = int_to_ptr.vmem [resolvable:$true] %s20
      %26 = dma.hbm_to_vmem [thread:$0]  %s0, 384, %s21, [#allocation4], 128, 128, 8
    $region5: #{tpu_custom_call.1} parent=1 // pred_fallthru
      _
    // Predicated region
    $region6: #{tpu_custom_call.1} parent=1 // pred_check
      _
    $region7: #{tpu_custom_call.1} parent=1 // pred_check_branch
      %28 = sbr.rel (0) target = $region9
    $region8: #{tpu_custom_call.1} parent=1 // pred_region
      %s30 = ssub.s32 16, 16
      %31 = vsyncadd [#allocation6], %s30
      %s33 = sshll.u32 %s1, 4
      %s34 = int_to_ptr.vmem [resolvable:$true] %s33
      %36 = dma.vmem_to_smem %s34, 16, [#allocation7], [#allocation6]
    $region9: #{tpu_custom_call.1} parent=1 // pred_fallthru
      _
    // Predicated region
    $region10: #{tpu_custom_call.1} parent=1 // pred_check
      _
    $region11: #{tpu_custom_call.1} parent=1 // pred_check_branch
      %38 = sbr.rel (0) target = $region13
    $region12: #{tpu_custom_call.1} parent=1 // pred_region
      %s40 = ssub.s32 16, 16
      %41 = vsyncadd [#allocation9], %s40
      %s43 = sshll.u32 %s2, 4
      %s44 = int_to_ptr.vmem [resolvable:$true] %s43
      %46 = dma.vmem_to_smem %s44, 16, [#allocation8], [#allocation9]
    $region13: #{tpu_custom_call.1} parent=1 // pred_fallthru
      _
    // Predicated region
    $region14: #{tpu_custom_call.1} parent=1 // pred_check
      _
    $region15: #{tpu_custom_call.1} parent=1 // pred_check_branch
      %48 = sbr.rel (0) target = $region17
    $region16: #{tpu_custom_call.1} parent=1 // pred_region
      %s50 = ssub.s32 16, 16
      %51 = vsyncadd [#allocation9], %s50
      %s53 = sshll.u32 %s3, 4
      %s54 = int_to_ptr.vmem [resolvable:$true] %s53
      %56 = dma.vmem_to_smem %s54, 16, [#allocation10], [#allocation9]
    $region17: #{tpu_custom_call.1} parent=1 // pred_fallthru
      _
    // Predicated region
    $region18: #{tpu_custom_call.1} parent=1 // pred_check
      _
    $region19: #{tpu_custom_call.1} parent=1 // pred_check_branch
      %58 = sbr.rel (0) target = $region21
    $region20: #{tpu_custom_call.1} parent=1 // pred_region
      _
    $region21: #{tpu_custom_call.1} parent=1 // pred_fallthru
      _
    // Predicated region
    $region22: #{tpu_custom_call.1} parent=1 // pred_check
      _
    $region23: #{tpu_custom_call.1} parent=1 // pred_check_branch
      %60 = sbr.rel (0) target = $region25
    $region24: #{tpu_custom_call.1} parent=1 // pred_region
      %61 = dma.done [#allocation4], 384
    $region25: #{tpu_custom_call.1} parent=1 // pred_fallthru
      _
    // Predicated region
    $region26: #{tpu_custom_call.1} parent=1 // pred_check
      _
    $region27: #{tpu_custom_call.1} parent=1 // pred_check_branch
      %63 = sbr.rel (0) target = $region29
    $region28: #{tpu_custom_call.1} parent=1 // pred_region
      %64 = dma.done [#allocation6], 16
    $region29: #{tpu_custom_call.1} parent=1 // pred_fallthru
      _
    // Predicated region
    $region30: #{tpu_custom_call.1} parent=1 // pred_check
      _
    $region31: #{tpu_custom_call.1} parent=1 // pred_check_branch
      %66 = sbr.rel (0) target = $region33
    $region32: #{tpu_custom_call.1} parent=1 // pred_region
      %67 = dma.done [#allocation9], 16
    $region33: #{tpu_custom_call.1} parent=1 // pred_fallthru
      _
    // Predicated region
    $region34: #{tpu_custom_call.1} parent=1 // pred_check
      _
    $region35: #{tpu_custom_call.1} parent=1 // pred_check_branch
      %69 = sbr.rel (0) target = $region37
    $region36: #{tpu_custom_call.1} parent=1 // pred_region
      %70 = dma.done [#allocation9], 16
    $region37: #{tpu_custom_call.1} parent=1 // pred_fallthru
      _
    %71 = sfence
    %v72 = vld [vmem:[#allocation3] sm:$0xff]
    %v73 = vld [vmem:[#allocation3 + $0x8] sm:$0xff]
    %v74 = vld [vmem:[#allocation3 + $0x1] sm:$0xff]
    %v75 = vld [vmem:[#allocation3 + $0x9] sm:$0xff]
    %v76 = vld [vmem:[#allocation3 + $0x2] sm:$0xff]
    %v77 = vld [vmem:[#allocation3 + $0xa] sm:$0xff]
    %s78 = sld [smem:[#allocation2]]
    %v79 = vstv %s78
    %s80 = sld [smem:[#allocation8]]
    %v81 = vstv %s80
    %s82 = sld [smem:[#allocation7]]
    %v83 = vstv %s82
    %v84 = vmul.f32 %v83, %v72
    %v85 = vmul.f32 %v83, %v73
    %v86 = vadd.f32 %v81, %v84
    %v87 = vadd.f32 %v81, %v85
    %s88 = sld [smem:[#allocation7 + $0x1]]
    %v89 = vstv %s88
    %v90 = vmul.f32 %v89, %v74
    %v91 = vmul.f32 %v89, %v75
    %v92 = vadd.f32 %v86, %v90
    %v93 = vadd.f32 %v87, %v91
    %s94 = sld [smem:[#allocation7 + $0x2]]
    %v95 = vstv %s94
    %v96 = vmul.f32 %v95, %v76
    %v97 = vmul.f32 %v95, %v77
    %v98 = vadd.f32 %v92, %v96
    %v99 = vadd.f32 %v93, %v97
    %s100 = sld [smem:[#allocation10]]
    %v101 = vtanh.pop %v98
    %v102 = vtanh.pop %v99
    %v103 = vstv %s100
    %v104 = vmul.f32 %v103, %v101
    %v105 = vmul.f32 %v103, %v102
    %v106 = vadd.f32 %v79, %v104
    %v107 = vadd.f32 %v79, %v105
    %s108 = sld [smem:[#allocation8 + $0x1]]
    %v109 = vstv %s108
    %s110 = sld [smem:[#allocation7 + $0x3]]
    %v111 = vstv %s110
    %v112 = vmul.f32 %v111, %v72
    %v113 = vmul.f32 %v111, %v73
    %v114 = vadd.f32 %v109, %v112
    %v115 = vadd.f32 %v109, %v113
    %s116 = sld [smem:[#allocation7 + $0x4]]
    %v117 = vstv %s116
    %v118 = vmul.f32 %v117, %v74
    %v119 = vmul.f32 %v117, %v75
    %v120 = vadd.f32 %v114, %v118
    %v121 = vadd.f32 %v115, %v119
    %s122 = sld [smem:[#allocation7 + $0x5]]
    %v123 = vstv %s122
    %v124 = vmul.f32 %v123, %v76
    %v125 = vmul.f32 %v123, %v77
    %v126 = vadd.f32 %v120, %v124
    %v127 = vadd.f32 %v121, %v125
    %s128 = sld [smem:[#allocation10 + $0x1]]
    %v129 = vtanh.pop %v126
    %v130 = vtanh.pop %v127
    %v131 = vstv %s128
    %v132 = vmul.f32 %v131, %v129
    %v133 = vmul.f32 %v131, %v130
    %v134 = vadd.f32 %v106, %v132
    %v135 = vadd.f32 %v107, %v133
    %s136 = sld [smem:[#allocation8 + $0x2]]
    %v137 = vstv %s136
    %s138 = sld [smem:[#allocation7 + $0x6]]
    %v139 = vstv %s138
    %v140 = vmul.f32 %v139, %v72
    %v141 = vmul.f32 %v139, %v73
    %v142 = vadd.f32 %v137, %v140
    %v143 = vadd.f32 %v137, %v141
    %s144 = sld [smem:[#allocation7 + $0x7]]
    %v145 = vstv %s144
    %v146 = vmul.f32 %v145, %v74
    %v147 = vmul.f32 %v145, %v75
    %v148 = vadd.f32 %v142, %v146
    %v149 = vadd.f32 %v143, %v147
    %s150 = sld [smem:[#allocation7 + $0x8]]
    %v151 = vstv %s150
    %v152 = vmul.f32 %v151, %v76
    %v153 = vmul.f32 %v151, %v77
    %v154 = vadd.f32 %v148, %v152
    %v155 = vadd.f32 %v149, %v153
    %s156 = sld [smem:[#allocation10 + $0x2]]
    %v157 = vtanh.pop %v154
    %v158 = vtanh.pop %v155
    %v159 = vstv %s156
    %v160 = vmul.f32 %v159, %v157
    %v161 = vmul.f32 %v159, %v158
    %v162 = vadd.f32 %v134, %v160
    %v163 = vadd.f32 %v135, %v161
    %s164 = sld [smem:[#allocation8 + $0x3]]
    %v165 = vstv %s164
    %s166 = sld [smem:[#allocation7 + $0x9]]
    %v167 = vstv %s166
    %v168 = vmul.f32 %v167, %v72
    %v169 = vmul.f32 %v167, %v73
    %v170 = vadd.f32 %v165, %v168
    %v171 = vadd.f32 %v165, %v169
    %s172 = sld [smem:[#allocation7 + $0xa]]
    %v173 = vstv %s172
    %v174 = vmul.f32 %v173, %v74
    %v175 = vmul.f32 %v173, %v75
    %v176 = vadd.f32 %v170, %v174
    %v177 = vadd.f32 %v171, %v175
    %s178 = sld [smem:[#allocation7 + $0xb]]
    %v179 = vstv %s178
    %v180 = vmul.f32 %v179, %v76
    %v181 = vmul.f32 %v179, %v77
    %v182 = vadd.f32 %v176, %v180
    %v183 = vadd.f32 %v177, %v181
    %s184 = sld [smem:[#allocation10 + $0x3]]
    %v185 = vtanh.pop %v182
    %v186 = vtanh.pop %v183
    %v187 = vstv %s184
    %v188 = vmul.f32 %v187, %v185
    %v189 = vmul.f32 %v187, %v186
    %v190 = vadd.f32 %v162, %v188
    %v191 = vadd.f32 %v163, %v189
    %s192 = sld [smem:[#allocation8 + $0x4]]
    %v193 = vstv %s192
    %s194 = sld [smem:[#allocation7 + $0xc]]
    %v195 = vstv %s194
    %v196 = vmul.f32 %v195, %v72
    %v197 = vmul.f32 %v195, %v73
    %v198 = vadd.f32 %v193, %v196
    %v199 = vadd.f32 %v193, %v197
    %s200 = sld [smem:[#allocation7 + $0xd]]
    %v201 = vstv %s200
    %v202 = vmul.f32 %v201, %v74
    %v203 = vmul.f32 %v201, %v75
    %v204 = vadd.f32 %v198, %v202
    %v205 = vadd.f32 %v199, %v203
    %s206 = sld [smem:[#allocation7 + $0xe]]
    %v207 = vstv %s206
    %v208 = vmul.f32 %v207, %v76
    %v209 = vmul.f32 %v207, %v77
    %v210 = vadd.f32 %v204, %v208
    %v211 = vadd.f32 %v205, %v209
    %s212 = sld [smem:[#allocation10 + $0x4]]
    %v213 = vtanh.pop %v210
    %v214 = vtanh.pop %v211
    %v215 = vstv %s212
    %v216 = vmul.f32 %v215, %v213
    %v217 = vmul.f32 %v215, %v214
    %v218 = vadd.f32 %v190, %v216
    %v219 = vadd.f32 %v191, %v217
    %s220 = sld [smem:[#allocation8 + $0x5]]
    %v221 = vstv %s220
    %s222 = sld [smem:[#allocation7 + $0xf]]
    %v223 = vstv %s222
    %v224 = vmul.f32 %v223, %v72
    %v225 = vmul.f32 %v223, %v73
    %v226 = vadd.f32 %v221, %v224
    %v227 = vadd.f32 %v221, %v225
    %s228 = sld [smem:[#allocation7 + $0x10]]
    %v229 = vstv %s228
    %v230 = vmul.f32 %v229, %v74
    %v231 = vmul.f32 %v229, %v75
    %v232 = vadd.f32 %v226, %v230
    %v233 = vadd.f32 %v227, %v231
    %s234 = sld [smem:[#allocation7 + $0x11]]
    %v235 = vstv %s234
    %v236 = vmul.f32 %v235, %v76
    %v237 = vmul.f32 %v235, %v77
    %v238 = vadd.f32 %v232, %v236
    %v239 = vadd.f32 %v233, %v237
    %s240 = sld [smem:[#allocation10 + $0x5]]
    %v241 = vtanh.pop %v238
    %v242 = vtanh.pop %v239
    %v243 = vstv %s240
    %v244 = vmul.f32 %v243, %v241
    %v245 = vmul.f32 %v243, %v242
    %v246 = vadd.f32 %v218, %v244
    %v247 = vadd.f32 %v219, %v245
    %s248 = sld [smem:[#allocation8 + $0x6]]
    %v249 = vstv %s248
    %s250 = sld [smem:[#allocation7 + $0x12]]
    %v251 = vstv %s250
    %v252 = vmul.f32 %v251, %v72
    %v253 = vmul.f32 %v251, %v73
    %v254 = vadd.f32 %v249, %v252
    %v255 = vadd.f32 %v249, %v253
    %s256 = sld [smem:[#allocation7 + $0x13]]
    %v257 = vstv %s256
    %v258 = vmul.f32 %v257, %v74
    %v259 = vmul.f32 %v257, %v75
    %v260 = vadd.f32 %v254, %v258
    %v261 = vadd.f32 %v255, %v259
    %s262 = sld [smem:[#allocation7 + $0x14]]
    %v263 = vstv %s262
    %v264 = vmul.f32 %v263, %v76
    %v265 = vmul.f32 %v263, %v77
    %v266 = vadd.f32 %v260, %v264
    %v267 = vadd.f32 %v261, %v265
    %s268 = sld [smem:[#allocation10 + $0x6]]
    %v269 = vtanh.pop %v266
    %v270 = vtanh.pop %v267
    %v271 = vstv %s268
    %v272 = vmul.f32 %v271, %v269
    %v273 = vmul.f32 %v271, %v270
    %v274 = vadd.f32 %v246, %v272
    %v275 = vadd.f32 %v247, %v273
    %s276 = sld [smem:[#allocation8 + $0x7]]
    %v277 = vstv %s276
    %s278 = sld [smem:[#allocation7 + $0x15]]
    %v279 = vstv %s278
    %v280 = vmul.f32 %v279, %v72
    %v281 = vmul.f32 %v279, %v73
    %v282 = vadd.f32 %v277, %v280
    %v283 = vadd.f32 %v277, %v281
    %s284 = sld [smem:[#allocation7 + $0x16]]
    %v285 = vstv %s284
    %v286 = vmul.f32 %v285, %v74
    %v287 = vmul.f32 %v285, %v75
    %v288 = vadd.f32 %v282, %v286
    %v289 = vadd.f32 %v283, %v287
    %s290 = sld [smem:[#allocation7 + $0x17]]
    %v291 = vstv %s290
    %v292 = vmul.f32 %v291, %v76
    %v293 = vmul.f32 %v291, %v77
    %v294 = vadd.f32 %v288, %v292
    %v295 = vadd.f32 %v289, %v293
    %s296 = sld [smem:[#allocation10 + $0x7]]
    %v297 = vtanh.pop %v294
    %v298 = vtanh.pop %v295
    %v299 = vstv %s296
    %v300 = vmul.f32 %v299, %v297
    %v301 = vmul.f32 %v299, %v298
    %v302 = vadd.f32 %v274, %v300
    %v303 = vadd.f32 %v275, %v301
    %s304 = sld [smem:[#allocation8 + $0x8]]
    %v305 = vstv %s304
    %s306 = sld [smem:[#allocation7 + $0x18]]
    %v307 = vstv %s306
    %v308 = vmul.f32 %v307, %v72
    %v309 = vmul.f32 %v307, %v73
    %v310 = vadd.f32 %v305, %v308
    %v311 = vadd.f32 %v305, %v309
    %s312 = sld [smem:[#allocation7 + $0x19]]
    %v313 = vstv %s312
    %v314 = vmul.f32 %v313, %v74
    %v315 = vmul.f32 %v313, %v75
    %v316 = vadd.f32 %v310, %v314
    %v317 = vadd.f32 %v311, %v315
    %s318 = sld [smem:[#allocation7 + $0x1a]]
    %v319 = vstv %s318
    %v320 = vmul.f32 %v319, %v76
    %v321 = vmul.f32 %v319, %v77
    %v322 = vadd.f32 %v316, %v320
    %v323 = vadd.f32 %v317, %v321
    %s324 = sld [smem:[#allocation10 + $0x8]]
    %v325 = vtanh.pop %v322
    %v326 = vtanh.pop %v323
    %v327 = vstv %s324
    %v328 = vmul.f32 %v327, %v325
    %v329 = vmul.f32 %v327, %v326
    %v330 = vadd.f32 %v302, %v328
    %v331 = vadd.f32 %v303, %v329
    %s332 = sld [smem:[#allocation8 + $0x9]]
    %v333 = vstv %s332
    %s334 = sld [smem:[#allocation7 + $0x1b]]
    %v335 = vstv %s334
    %v336 = vmul.f32 %v335, %v72
    %v337 = vmul.f32 %v335, %v73
    %v338 = vadd.f32 %v333, %v336
    %v339 = vadd.f32 %v333, %v337
    %s340 = sld [smem:[#allocation7 + $0x1c]]
    %v341 = vstv %s340
    %v342 = vmul.f32 %v341, %v74
    %v343 = vmul.f32 %v341, %v75
    %v344 = vadd.f32 %v338, %v342
    %v345 = vadd.f32 %v339, %v343
    %s346 = sld [smem:[#allocation7 + $0x1d]]
    %v347 = vstv %s346
    %v348 = vmul.f32 %v347, %v76
    %v349 = vmul.f32 %v347, %v77
    %v350 = vadd.f32 %v344, %v348
    %v351 = vadd.f32 %v345, %v349
    %s352 = sld [smem:[#allocation10 + $0x9]]
    %v353 = vtanh.pop %v350
    %v354 = vtanh.pop %v351
    %v355 = vstv %s352
    %v356 = vmul.f32 %v355, %v353
    %v357 = vmul.f32 %v355, %v354
    %v358 = vadd.f32 %v330, %v356
    %v359 = vadd.f32 %v331, %v357
    %360 = vst [vmem:[#allocation11] sm:$0xff] %v358
    %361 = vst [vmem:[#allocation11 + $0x8] sm:$0xff] %v359
    // Predicated region
    $region38: #{tpu_custom_call.1} parent=1 // pred_check
      _
    $region39: #{tpu_custom_call.1} parent=1 // pred_check_branch
      %363 = sbr.rel (0) target = $region41
    $region40: #{tpu_custom_call.1} parent=1 // pred_region
      %s365 = ssub.s32 256, 256
      %366 = vsyncadd [#allocation5], %s365
      %s367 = sshll.u32 [#allocation11], 4
      %s368 = int_to_ptr.vmem [resolvable:$true] %s367
      %373 = dma.vmem_to_hbm [thread:$0]  %s368, 256, %s5, [#allocation5], 128, 128, 8
    $region41: #{tpu_custom_call.1} parent=1 // pred_fallthru
      _
    // Predicated region
    $region42: #{tpu_custom_call.1} parent=1 // pred_check
      _
    $region43: #{tpu_custom_call.1} parent=1 // pred_check_branch
      %375 = sbr.rel (0) target = $region45
    $region44: #{tpu_custom_call.1} parent=1 // pred_region
      %376 = dma.done [#allocation5], 256
    $region45: #{tpu_custom_call.1} parent=1 // pred_fallthru
      _
    %377 = vsyncpa [#allocation4], 1
    %378 = vsyncpa [#allocation5], 1
    %379 = vsyncpa [#allocation6], 1
    %380 = vsyncpa [#allocation9], 1

</llo_original>
